<compile_context>
chip_gen: v7x
topology: tpu7x:2x2x1
jax: 0.10.0
libtpu: 0.0.40
codegen_flags: <defaults>
</compile_context>

<pallas_src>
import jax
import jax.numpy as jnp
from jax.experimental import pallas as pl
from jax.experimental.pallas import tpu as pltpu

LANES = 512                 # lane-dense width (multiple of 128)
DEFAULT_BLOCK_ROWS = 1024   # (1024, 512) f32 = 2 MiB/block -> ~8 MiB double-buffered
TARGET_BLOCKS = 8           # aim for >= 8 parallel blocks (2 TCs x ~4) on big inputs
SMALL_N_THRESHOLD = 65536   # below this, plain XLA beats kernel-launch overhead
HIDDEN = 10


def mlp_kernel(p_ref, x_ref, o_ref):
    # p_ref: SMEM f32[22] = [t(10) | q(10) | P | Q]
    # y = P*x + Q + sum_k q_k * |x + t_k|   (== b2 + sum_k relu(w1_k x + b1_k) w2_k)
    # Per element: 3 + 9*4 + 3 = 42 VALU ops (add/abs/mul), no b2 splat.
    x = x_ref[...]
    acc = p_ref[HIDDEN] * jnp.abs(x + p_ref[0])          # k = 0 initializes acc
    for k in range(1, HIDDEN):                           # unrolled at trace time
        acc = acc + p_ref[HIDDEN + k] * jnp.abs(x + p_ref[k])
    o_ref[...] = (p_ref[2 * HIDDEN] * x + acc + p_ref[2 * HIDDEN + 1]).astype(o_ref.dtype)


def _fold_params(w1, b1, w2, b2):
    """Fold (w1,b1,w2,b2) into [t(10) | q(10) | P | Q] for the |.|-form kernel."""
    w1f = jnp.asarray(w1, jnp.float32).reshape(-1)
    b1f = jnp.asarray(b1, jnp.float32).reshape(-1)
    w2f = jnp.asarray(w2, jnp.float32).reshape(-1)
    b2f = jnp.asarray(b2, jnp.float32).reshape(-1)
    live = jnp.abs(w1f) > 1e-30                       # guard w1_k ~ 0
    safe_w1 = jnp.where(live, w1f, 1.0)
    t = jnp.where(live, b1f / safe_w1, 0.0)
    q = jnp.where(live, 0.5 * w2f * jnp.abs(w1f), 0.0)
    P = jnp.sum(jnp.where(live, 0.5 * w2f * w1f, 0.0))
    # Dead units contribute the constant relu(b1_k)*w2_k instead.
    Q = b2f[0] + jnp.sum(jnp.where(live, 0.5 * w2f * b1f,
                                   w2f * jnp.maximum(b1f, 0.0)))
    return jnp.concatenate([t, q, jnp.stack([P, Q])])   # (22,)


def _pick_tm(rows, block_rows):
    """Row-tile size: multiple of 8, <= block_rows, >= ~TARGET_BLOCKS blocks."""
    if rows <= 8:
        return rows                                   # full-extent block
    tm = min(block_rows, max(8, (rows + TARGET_BLOCKS - 1) // TARGET_BLOCKS))
    return ((tm + 7) // 8) * 8


def _reference(x, w1, b1, w2, b2):
    """Pure elementwise f32 reference (no matmul -> no MXU precision ambiguity)."""
    xf = jnp.asarray(x, jnp.float32).reshape(-1, 1)
    h = jnp.maximum(xf * w1.reshape(1, -1) + b1.reshape(1, -1), 0.0)
    return jnp.sum(h * w2.reshape(1, -1), axis=1, keepdims=True) + b2.reshape(-1)


def net_forward(x, w1, b1, w2, b2, *, block_rows=DEFAULT_BLOCK_ROWS,
                min_pallas_elems=SMALL_N_THRESHOLD):
    """Pallas forward for Net: Linear(1,10) -> ReLU -> Linear(10,1).

    x : (N, 1) or (N,) float32
    w1: (10, 1), b1: (10,)   (PyTorch nn.Linear layout: (out, in))
    w2: (1, 10), b2: (1,)
    returns (N, 1) float32
    """
    n = x.shape[0]

    # Small-N fast path: kernel launch + per-step overhead dominates; XLA fuses this.
    if n < min_pallas_elems:
        return _reference(x, w1, b1, w2, b2).astype(jnp.float32)

    params = _fold_params(w1, b1, w2, b2)              # (22,) f32, SMEM-resident

    # Lane-dense layout: flatten the batch onto lanes.
    xf = jnp.asarray(x, jnp.float32).reshape(-1)
    padded = pl.cdiv(n, LANES) * LANES
    ragged = padded != n
    if ragged:
        # Extra HBM pass only when N is not a multiple of LANES; feed
        # LANES-multiple batches to hit the zero-copy path.
        xf = jnp.pad(xf, (0, padded - n))
    rows = padded // LANES
    x2 = xf.reshape(rows, LANES)                       # free when not ragged

    tm = _pick_tm(rows, block_rows)
    grid = (pl.cdiv(rows, tm),)                        # partial last block is fine

    out2 = pl.pallas_call(
        mlp_kernel,
        out_shape=jax.ShapeDtypeStruct((rows, LANES), jnp.float32),
        grid_spec=pltpu.PrefetchScalarGridSpec(
            num_scalar_prefetch=0,
            grid=grid,
            in_specs=[
                pl.BlockSpec(memory_space=pltpu.MemorySpace.SMEM),  # folded params
                pl.BlockSpec((tm, LANES), lambda i: (i, 0)),        # x tiles
            ],
            out_specs=pl.BlockSpec((tm, LANES), lambda i: (i, 0)),
        ),
        compiler_params=pltpu.CompilerParams(
            dimension_semantics=("parallel",),
        ),
    )(params, x2)

    yf = out2.reshape(-1)
    if ragged:
        yf = yf[:n]
    return yf.reshape(n, 1)


def init_params(key):
    """Deterministic init mimicking PyTorch nn.Linear default U(-1/sqrt(fan_in), +)."""
    k1, k2, k3, k4 = jax.random.split(key, 4)
    bound1 = 1.0 / jnp.sqrt(1.0)      # fc1 fan_in = 1
    bound2 = 1.0 / jnp.sqrt(10.0)     # out fan_in = 10
    w1 = jax.random.uniform(k1, (10, 1), jnp.float32, -bound1, bound1)
    b1 = jax.random.uniform(k2, (10,), jnp.float32, -bound1, bound1)
    w2 = jax.random.uniform(k3, (1, 10), jnp.float32, -bound2, bound2)
    b2 = jax.random.uniform(k4, (1,), jnp.float32, -bound2, bound2)
    return w1, b1, w2, b2


if __name__ == "__main__":
    key = jax.random.PRNGKey(0)
    kx1, kx2, kx3, kp = jax.random.split(key, 4)
    w1, b1, w2, b2 = init_params(kp)

    # Case A: tiny batch -> small-N fast path (plain XLA; no kernel launch).
    x_small = jax.random.normal(kx1, (8, 1), jnp.float32)
    y_small = jax.block_until_ready(net_forward(x_small, w1, b1, w2, b2))
    assert y_small.shape == (8, 1)
    assert jnp.allclose(y_small, _reference(x_small, w1, b1, w2, b2),
                        atol=1e-5, rtol=1e-5)

    # Case B: same tiny batch forced through the Pallas kernel
    # (exercises padding to a single partial lane-dense tile).
    y_small_pl = jax.block_until_ready(
        net_forward(x_small, w1, b1, w2, b2, min_pallas_elems=0))
    assert y_small_pl.shape == (8, 1)
    assert jnp.allclose(y_small_pl, _reference(x_small, w1, b1, w2, b2),
                        atol=2e-5, rtol=2e-5)

    # Case C: LANES-multiple batch -> zero-copy path (no pad / no tail slice),
    # 8 evenly-sized parallel blocks for megacore sharding.
    n_even = 256 * LANES                      # 131072 elements (~0.5 MB)
    x_even = jax.random.normal(kx2, (n_even, 1), jnp.float32)
    y_even = jax.block_until_ready(net_forward(x_even, w1, b1, w2, b2))
    assert y_even.shape == (n_even, 1)
    assert jnp.allclose(y_even, _reference(x_even, w1, b1, w2, b2),
                        atol=1e-4, rtol=1e-4)

    # Case D: ragged batch -> padded tail row + partial last grid block.
    n_rag = 70_000
    x_rag = jax.random.normal(kx3, (n_rag, 1), jnp.float32)
    y_rag = jax.block_until_ready(net_forward(x_rag, w1, b1, w2, b2))
    assert y_rag.shape == (n_rag, 1)
    assert jnp.allclose(y_rag, _reference(x_rag, w1, b1, w2, b2),
                        atol=1e-4, rtol=1e-4)

    print("KERNEL_OK")
</pallas_src>

<mosaic_0001>
module attributes {stable_mosaic.version = 11 : i64} {
  func.func @mlp_kernel(%arg0: i32, %arg1: memref<22xf32, #tpu.memory_space<smem>>, %arg2: memref<1x512xf32, #tpu.memory_space<vmem>>, %arg3: memref<1x512xf32, #tpu.memory_space<vmem>>) attributes {dimension_semantics = [#tpu.dimension_semantics<parallel>], iteration_bounds = array<i64: 1>, scalar_prefetch = 0 : i64, scratch_operands = 0 : i64, tpu.core_type = #tpu.core_type<tc>, window_params = [{transform_indices = @transform_0, window_bounds = array<i64: 22>}, {transform_indices = @transform_1, window_bounds = array<i64: 1, 512>}, {transform_indices = @transform_2, window_bounds = array<i64: 1, 512>}]} {
    %c0 = arith.constant 0 : index
    %c0_0 = arith.constant 0 : index
    %0 = vector.load %arg2[%c0, %c0_0] : memref<1x512xf32, #tpu.memory_space<vmem>>, vector<1x512xf32>
    %c10 = arith.constant 10 : index
    %1 = memref.load %arg1[%c10] : memref<22xf32, #tpu.memory_space<smem>>
    %c0_1 = arith.constant 0 : index
    %2 = memref.load %arg1[%c0_1] : memref<22xf32, #tpu.memory_space<smem>>
    %3 = vector.broadcast %2 : f32 to vector<1x512xf32>
    %4 = arith.addf %0, %3 : vector<1x512xf32>
    %5 = math.absf %4 : vector<1x512xf32>
    %6 = vector.broadcast %1 : f32 to vector<1x512xf32>
    %7 = arith.mulf %6, %5 : vector<1x512xf32>
    %c11 = arith.constant 11 : index
    %8 = memref.load %arg1[%c11] : memref<22xf32, #tpu.memory_space<smem>>
    %c1 = arith.constant 1 : index
    %9 = memref.load %arg1[%c1] : memref<22xf32, #tpu.memory_space<smem>>
    %10 = vector.broadcast %9 : f32 to vector<1x512xf32>
    %11 = arith.addf %0, %10 : vector<1x512xf32>
    %12 = math.absf %11 : vector<1x512xf32>
    %13 = vector.broadcast %8 : f32 to vector<1x512xf32>
    %14 = arith.mulf %13, %12 : vector<1x512xf32>
    %15 = arith.addf %7, %14 : vector<1x512xf32>
    %c12 = arith.constant 12 : index
    %16 = memref.load %arg1[%c12] : memref<22xf32, #tpu.memory_space<smem>>
    %c2 = arith.constant 2 : index
    %17 = memref.load %arg1[%c2] : memref<22xf32, #tpu.memory_space<smem>>
    %18 = vector.broadcast %17 : f32 to vector<1x512xf32>
    %19 = arith.addf %0, %18 : vector<1x512xf32>
    %20 = math.absf %19 : vector<1x512xf32>
    %21 = vector.broadcast %16 : f32 to vector<1x512xf32>
    %22 = arith.mulf %21, %20 : vector<1x512xf32>
    %23 = arith.addf %15, %22 : vector<1x512xf32>
    %c13 = arith.constant 13 : index
    %24 = memref.load %arg1[%c13] : memref<22xf32, #tpu.memory_space<smem>>
    %c3 = arith.constant 3 : index
    %25 = memref.load %arg1[%c3] : memref<22xf32, #tpu.memory_space<smem>>
    %26 = vector.broadcast %25 : f32 to vector<1x512xf32>
    %27 = arith.addf %0, %26 : vector<1x512xf32>
    %28 = math.absf %27 : vector<1x512xf32>
    %29 = vector.broadcast %24 : f32 to vector<1x512xf32>
    %30 = arith.mulf %29, %28 : vector<1x512xf32>
    %31 = arith.addf %23, %30 : vector<1x512xf32>
    %c14 = arith.constant 14 : index
    %32 = memref.load %arg1[%c14] : memref<22xf32, #tpu.memory_space<smem>>
    %c4 = arith.constant 4 : index
    %33 = memref.load %arg1[%c4] : memref<22xf32, #tpu.memory_space<smem>>
    %34 = vector.broadcast %33 : f32 to vector<1x512xf32>
    %35 = arith.addf %0, %34 : vector<1x512xf32>
    %36 = math.absf %35 : vector<1x512xf32>
    %37 = vector.broadcast %32 : f32 to vector<1x512xf32>
    %38 = arith.mulf %37, %36 : vector<1x512xf32>
    %39 = arith.addf %31, %38 : vector<1x512xf32>
    %c15 = arith.constant 15 : index
    %40 = memref.load %arg1[%c15] : memref<22xf32, #tpu.memory_space<smem>>
    %c5 = arith.constant 5 : index
    %41 = memref.load %arg1[%c5] : memref<22xf32, #tpu.memory_space<smem>>
    %42 = vector.broadcast %41 : f32 to vector<1x512xf32>
    %43 = arith.addf %0, %42 : vector<1x512xf32>
    %44 = math.absf %43 : vector<1x512xf32>
    %45 = vector.broadcast %40 : f32 to vector<1x512xf32>
    %46 = arith.mulf %45, %44 : vector<1x512xf32>
    %47 = arith.addf %39, %46 : vector<1x512xf32>
    %c16 = arith.constant 16 : index
    %48 = memref.load %arg1[%c16] : memref<22xf32, #tpu.memory_space<smem>>
    %c6 = arith.constant 6 : index
    %49 = memref.load %arg1[%c6] : memref<22xf32, #tpu.memory_space<smem>>
    %50 = vector.broadcast %49 : f32 to vector<1x512xf32>
    %51 = arith.addf %0, %50 : vector<1x512xf32>
    %52 = math.absf %51 : vector<1x512xf32>
    %53 = vector.broadcast %48 : f32 to vector<1x512xf32>
    %54 = arith.mulf %53, %52 : vector<1x512xf32>
    %55 = arith.addf %47, %54 : vector<1x512xf32>
    %c17 = arith.constant 17 : index
    %56 = memref.load %arg1[%c17] : memref<22xf32, #tpu.memory_space<smem>>
    %c7 = arith.constant 7 : index
    %57 = memref.load %arg1[%c7] : memref<22xf32, #tpu.memory_space<smem>>
    %58 = vector.broadcast %57 : f32 to vector<1x512xf32>
    %59 = arith.addf %0, %58 : vector<1x512xf32>
    %60 = math.absf %59 : vector<1x512xf32>
    %61 = vector.broadcast %56 : f32 to vector<1x512xf32>
    %62 = arith.mulf %61, %60 : vector<1x512xf32>
    %63 = arith.addf %55, %62 : vector<1x512xf32>
    %c18 = arith.constant 18 : index
    %64 = memref.load %arg1[%c18] : memref<22xf32, #tpu.memory_space<smem>>
    %c8 = arith.constant 8 : index
    %65 = memref.load %arg1[%c8] : memref<22xf32, #tpu.memory_space<smem>>
    %66 = vector.broadcast %65 : f32 to vector<1x512xf32>
    %67 = arith.addf %0, %66 : vector<1x512xf32>
    %68 = math.absf %67 : vector<1x512xf32>
    %69 = vector.broadcast %64 : f32 to vector<1x512xf32>
    %70 = arith.mulf %69, %68 : vector<1x512xf32>
    %71 = arith.addf %63, %70 : vector<1x512xf32>
    %c19 = arith.constant 19 : index
    %72 = memref.load %arg1[%c19] : memref<22xf32, #tpu.memory_space<smem>>
    %c9 = arith.constant 9 : index
    %73 = memref.load %arg1[%c9] : memref<22xf32, #tpu.memory_space<smem>>
    %74 = vector.broadcast %73 : f32 to vector<1x512xf32>
    %75 = arith.addf %0, %74 : vector<1x512xf32>
    %76 = math.absf %75 : vector<1x512xf32>
    %77 = vector.broadcast %72 : f32 to vector<1x512xf32>
    %78 = arith.mulf %77, %76 : vector<1x512xf32>
    %79 = arith.addf %71, %78 : vector<1x512xf32>
    %c20 = arith.constant 20 : index
    %80 = memref.load %arg1[%c20] : memref<22xf32, #tpu.memory_space<smem>>
    %81 = vector.broadcast %80 : f32 to vector<1x512xf32>
    %82 = arith.mulf %81, %0 : vector<1x512xf32>
    %83 = arith.addf %82, %79 : vector<1x512xf32>
    %c21 = arith.constant 21 : index
    %84 = memref.load %arg1[%c21] : memref<22xf32, #tpu.memory_space<smem>>
    %85 = vector.broadcast %84 : f32 to vector<1x512xf32>
    %86 = arith.addf %83, %85 : vector<1x512xf32>
    %c0_2 = arith.constant 0 : index
    %c0_3 = arith.constant 0 : index
    %87 = vector.load %arg3[%c0_2, %c0_3] : memref<1x512xf32, #tpu.memory_space<vmem>>, vector<1x512xf32>
    tpu.vector_store %arg3[%c0_2, %c0_3], %86 {strides = array<i32>} : memref<1x512xf32, #tpu.memory_space<vmem>>, vector<1x512xf32>,
    return
  }
  func.func @transform_0(%arg0: i32) -> i32 {
    %c0_i32 = arith.constant 0 : i32
    %c0_i32_0 = arith.constant 0 : i32
    return %c0_i32 : i32
  }
  func.func @transform_1(%arg0: i32) -> (i32, i32) {
    %c0_i32 = arith.constant 0 : i32
    %c0_i32_0 = arith.constant 0 : i32
    return %arg0, %c0_i32 : i32, i32
  }
  func.func @transform_2(%arg0: i32) -> (i32, i32) {
    %c0_i32 = arith.constant 0 : i32
    %c0_i32_0 = arith.constant 0 : i32
    return %arg0, %c0_i32 : i32, i32
  }
}

</mosaic_0001>

<llo_original>
// kernel: tpu_custom_call.1
$region0: #{tpu_custom_call.1}
  #allocation0 [shape = 'u32[]', space=smem, size = 0x4, offset = 0x4, fixed_abs, tag = 'smem constant byte address 0x4 - core index']
  #allocation1 [shape = 'u32[144,128]{1,0:T(1,128)}', space=vmem, size = 0x12000, scoped, tag = 'internal scratch']
  %s0 = inlined_call_operand.hbm [shape: f32[22], index: 0, kind: input, shape index: {}]
  %s1 = inlined_call_operand.hbm [shape: f32[1,512], index: 1, kind: input, shape index: {}]
  %s2 = inlined_call_operand.hbm [shape: f32[1,512], index: 2, kind: output, shape index: {}]
  %s3 = sld [smem:[#allocation0]]
  $region26: #{tpu_custom_call.1} parent=0
    _
  %s5 = ssub.s32 1, %s3
  %s6 = scalar_select 0, %s5, %s3
  $region1: #{tpu_custom_call.1} parent=0
    #allocation2 [shape = 'u8[512]{0}', space=smem, size = 0x200, scoped, tag = 'input window, operand 0, single buffered']
    #allocation3 [shape = 's32[1]{0}', space=sflag, size = 0x4, scoped, tag = 'scoped memory for tpu_custom_call.1']
    #allocation4 [shape = 's32[1]{0}', space=sflag, size = 0x4, scoped, tag = 'scoped memory for tpu_custom_call.1']
    #allocation5 [shape = 's32[1]{0}', space=sflag, size = 0x4, scoped, tag = 'scoped memory for tpu_custom_call.1']
    #allocation6 [shape = 'u8[2048]{0}', space=vmem, size = 0x800, scoped, tag = 'input window, operand 1, single buffered']
    #allocation7 [shape = 'u8[2048]{0}', space=vmem, size = 0x800, scoped, tag = 'output window, operand 0, single buffered']
    %7 = vsyncpa [#allocation5], 0
    %8 = vsyncpa [#allocation3], 0
    %9 = vsyncpa [#allocation4], 0
    // Predicated region
    $region2: #{tpu_custom_call.1} parent=1 // pred_check
      _
    $region3: #{tpu_custom_call.1} parent=1 // pred_check_branch
      %11 = sbr.rel (0) target = $region5
    $region4: #{tpu_custom_call.1} parent=1 // pred_region
      %s13 = ssub.s32 16, 16
      %14 = vsyncadd [#allocation5], %s13
      %17 = dma.hbm_to_smem %s0, 16, [#allocation2], [#allocation5]
    $region5: #{tpu_custom_call.1} parent=1 // pred_fallthru
      _
    // Predicated region
    $region6: #{tpu_custom_call.1} parent=1 // pred_check
      _
    $region7: #{tpu_custom_call.1} parent=1 // pred_check_branch
      %19 = sbr.rel (0) target = $region9
    $region8: #{tpu_custom_call.1} parent=1 // pred_region
      %s21 = ssub.s32 64, 64
      %22 = vsyncadd [#allocation3], %s21
      %s24 = sshll.u32 [#allocation6], 4
      %s25 = int_to_ptr.vmem [resolvable:$true] %s24
      %27 = dma.hbm_to_vmem [thread:$0]  %s1, 64, %s25, [#allocation3]
    $region9: #{tpu_custom_call.1} parent=1 // pred_fallthru
      _
    // Predicated region
    $region10: #{tpu_custom_call.1} parent=1 // pred_check
      _
    $region11: #{tpu_custom_call.1} parent=1 // pred_check_branch
      %29 = sbr.rel (0) target = $region13
    $region12: #{tpu_custom_call.1} parent=1 // pred_region
      %30 = dma.done [#allocation5], 16
    $region13: #{tpu_custom_call.1} parent=1 // pred_fallthru
      _
    // Predicated region
    $region14: #{tpu_custom_call.1} parent=1 // pred_check
      _
    $region15: #{tpu_custom_call.1} parent=1 // pred_check_branch
      %32 = sbr.rel (0) target = $region17
    $region16: #{tpu_custom_call.1} parent=1 // pred_region
      %33 = dma.done [#allocation3], 64
    $region17: #{tpu_custom_call.1} parent=1 // pred_fallthru
      _
    %34 = sfence
    %v35 = vld [vmem:[#allocation6] sm:$0xf]
    %s36 = sld [smem:[#allocation2 + $0xa]]
    %s37 = sld [smem:[#allocation2]]
    %v38 = vstv %s37
    %v39 = vadd.f32 %v35, %v38
    %v40 = vand.u32 2147483647, %v39
    %v41 = vstv %s36
    %v42 = vmul.f32 %v41, %v40
    %s43 = sld [smem:[#allocation2 + $0xb]]
    %s44 = sld [smem:[#allocation2 + $0x1]]
    %v45 = vstv %s44
    %v46 = vadd.f32 %v35, %v45
    %v47 = vand.u32 2147483647, %v46
    %v48 = vstv %s43
    %v49 = vmul.f32 %v48, %v47
    %v50 = vadd.f32 %v42, %v49
    %s51 = sld [smem:[#allocation2 + $0xc]]
    %s52 = sld [smem:[#allocation2 + $0x2]]
    %v53 = vstv %s52
    %v54 = vadd.f32 %v35, %v53
    %v55 = vand.u32 2147483647, %v54
    %v56 = vstv %s51
    %v57 = vmul.f32 %v56, %v55
    %v58 = vadd.f32 %v50, %v57
    %s59 = sld [smem:[#allocation2 + $0xd]]
    %s60 = sld [smem:[#allocation2 + $0x3]]
    %v61 = vstv %s60
    %v62 = vadd.f32 %v35, %v61
    %v63 = vand.u32 2147483647, %v62
    %v64 = vstv %s59
    %v65 = vmul.f32 %v64, %v63
    %v66 = vadd.f32 %v58, %v65
    %s67 = sld [smem:[#allocation2 + $0xe]]
    %s68 = sld [smem:[#allocation2 + $0x4]]
    %v69 = vstv %s68
    %v70 = vadd.f32 %v35, %v69
    %v71 = vand.u32 2147483647, %v70
    %v72 = vstv %s67
    %v73 = vmul.f32 %v72, %v71
    %v74 = vadd.f32 %v66, %v73
    %s75 = sld [smem:[#allocation2 + $0xf]]
    %s76 = sld [smem:[#allocation2 + $0x5]]
    %v77 = vstv %s76
    %v78 = vadd.f32 %v35, %v77
    %v79 = vand.u32 2147483647, %v78
    %v80 = vstv %s75
    %v81 = vmul.f32 %v80, %v79
    %v82 = vadd.f32 %v74, %v81
    %s83 = sld [smem:[#allocation2 + $0x10]]
    %s84 = sld [smem:[#allocation2 + $0x6]]
    %v85 = vstv %s84
    %v86 = vadd.f32 %v35, %v85
    %v87 = vand.u32 2147483647, %v86
    %v88 = vstv %s83
    %v89 = vmul.f32 %v88, %v87
    %v90 = vadd.f32 %v82, %v89
    %s91 = sld [smem:[#allocation2 + $0x11]]
    %s92 = sld [smem:[#allocation2 + $0x7]]
    %v93 = vstv %s92
    %v94 = vadd.f32 %v35, %v93
    %v95 = vand.u32 2147483647, %v94
    %v96 = vstv %s91
    %v97 = vmul.f32 %v96, %v95
    %v98 = vadd.f32 %v90, %v97
    %s99 = sld [smem:[#allocation2 + $0x12]]
    %s100 = sld [smem:[#allocation2 + $0x8]]
    %v101 = vstv %s100
    %v102 = vadd.f32 %v35, %v101
    %v103 = vand.u32 2147483647, %v102
    %v104 = vstv %s99
    %v105 = vmul.f32 %v104, %v103
    %v106 = vadd.f32 %v98, %v105
    %s107 = sld [smem:[#allocation2 + $0x13]]
    %s108 = sld [smem:[#allocation2 + $0x9]]
    %v109 = vstv %s108
    %v110 = vadd.f32 %v35, %v109
    %v111 = vand.u32 2147483647, %v110
    %v112 = vstv %s107
    %v113 = vmul.f32 %v112, %v111
    %v114 = vadd.f32 %v106, %v113
    %s115 = sld [smem:[#allocation2 + $0x14]]
    %v116 = vstv %s115
    %v117 = vmul.f32 %v116, %v35
    %v118 = vadd.f32 %v117, %v114
    %s119 = sld [smem:[#allocation2 + $0x15]]
    %v120 = vstv %s119
    %v121 = vadd.f32 %v118, %v120
    %v122 = vlaneseq
    %vm123 = vcmp.ge.s32.totalorder %v122, 0
    %vm124 = vcmp.lt.s32.totalorder %v122, 512
    %vm125 = vmand %vm123, %vm124
    %126 = vst.msk [vmem:[#allocation7] sm:$0xf] %vm125, %v121
    // Predicated region
    $region18: #{tpu_custom_call.1} parent=1 // pred_check
      _
    $region19: #{tpu_custom_call.1} parent=1 // pred_check_branch
      %128 = sbr.rel (0) target = $region21
    $region20: #{tpu_custom_call.1} parent=1 // pred_region
      %s130 = ssub.s32 64, 64
      %131 = vsyncadd [#allocation4], %s130
      %s133 = sshll.u32 [#allocation7], 4
      %s134 = int_to_ptr.vmem [resolvable:$true] %s133
      %136 = dma.vmem_to_hbm [thread:$0]  %s134, 64, %s2, [#allocation4]
    $region21: #{tpu_custom_call.1} parent=1 // pred_fallthru
      _
    // Predicated region
    $region22: #{tpu_custom_call.1} parent=1 // pred_check
      _
    $region23: #{tpu_custom_call.1} parent=1 // pred_check_branch
      %138 = sbr.rel (0) target = $region25
    $region24: #{tpu_custom_call.1} parent=1 // pred_region
      %139 = dma.done [#allocation4], 64
    $region25: #{tpu_custom_call.1} parent=1 // pred_fallthru
      _
    %140 = vsyncpa [#allocation3], 1
    %141 = vsyncpa [#allocation4], 1
    %142 = vsyncpa [#allocation5], 1

</llo_original>
